<compile_context>
chip_gen: v7x
topology: tpu7x:2x2x1
jax: 0.10.0
libtpu: 0.0.40
codegen_flags: <defaults>
</compile_context>

<pallas_src>
import jax
import jax.numpy as jnp
import numpy as np
from jax.experimental import pallas as pl
from jax.experimental.pallas import tpu as pltpu

# ---- small, module-consistent sizes (module defaults are width=512, depth=8) ----
WIDTH = 128          # hidden width W (lane-aligned)
DEPTH = 3            # number of backbone blocks
IN_FEATURES = 16     # LazyLinear infers this from the input
NUM_CLASSES = 2      # classification head
OUT_PAD = 128        # lane-dense padded head width
BATCH = 16
TB_MAX = 1024        # max batch tile (amortizes ~0.35 us/step grid overhead)

LEAKY_SLOPE = 0.01   # torch.nn.LeakyReLU default
BN_EPS = 1e-5        # torch.nn.BatchNorm1d default


def _round_up(x, m):
    return ((x + m - 1) // m) * m


def mlp_kernel(x_ref, w_ref, bias_ref, w_out_ref, b_out_ref, o_ref):
    # x_ref: (tb, WIDTH) bf16 -- input features zero-padded to WIDTH lanes.
    h = x_ref[...]

    # backbone: DEPTH x [Linear (input-Linear + BN pre-folded) -> Dropout(identity) -> LeakyReLU]
    for d in range(DEPTH):                       # static unrolled loop (DEPTH=3)
        z = jnp.dot(h, w_ref[d],
                    preferred_element_type=jnp.float32) + bias_ref[d]
        z = jnp.maximum(z, LEAKY_SLOPE * z)      # LeakyReLU, 2 VALU ops/elem
        h = z.astype(jnp.bfloat16)

    # output Linear (lane-dense padded head); logits live in columns [:NUM_CLASSES]
    o_ref[...] = jnp.dot(h, w_out_ref[...],
                         preferred_element_type=jnp.float32) + b_out_ref[...]


def prepare_params(params):
    """One-time prep: fold eval-mode BN + input Linear, pad, cast to bf16."""
    (w_in, b_in, w_stack, bn_g, bn_b, bn_m, bn_v, w_out, b_out) = params

    # Fold eval-mode BatchNorm into each hidden Linear (column scale + bias).
    scale = bn_g * jax.lax.rsqrt(bn_v + BN_EPS)                 # (DEPTH, WIDTH)
    w_fold = w_stack * scale[:, None, :]                        # (DEPTH, W, W)
    bias_fold = bn_b - bn_m * scale                             # (DEPTH, WIDTH)

    # Fuse the input Linear into the first backbone layer (exact: no activation
    # in between).  Done in f32 before any bf16 cast.
    w0 = w_in @ w_fold[0]                                       # (IN, W) f32
    b0 = b_in @ w_fold[0] + bias_fold[0][None, :]               # (1, W)  f32

    # Zero-pad layer-0 rows IN_FEATURES -> WIDTH so all layers share one stack
    # and x can be a lane-dense (tb, WIDTH) tile.
    assert IN_FEATURES <= WIDTH
    w0_pad = jnp.zeros((WIDTH, WIDTH), jnp.float32).at[:IN_FEATURES, :].set(w0)
    w_all = jnp.concatenate([w0_pad[None], w_fold[1:]], axis=0)             # (D, W, W)
    bias_all = jnp.concatenate([b0[None], bias_fold[1:, None, :]], axis=0)  # (D, 1, W)

    # Lane-dense padded classifier head.
    w_out_p = jnp.zeros((WIDTH, OUT_PAD), jnp.float32).at[:, :NUM_CLASSES].set(w_out)
    b_out_p = jnp.zeros((1, OUT_PAD), jnp.float32).at[:, :NUM_CLASSES].set(b_out)

    return (w_all.astype(jnp.bfloat16),      # (D, W, W) bf16
            bias_all.astype(jnp.float32),    # (D, 1, W) f32
            w_out_p.astype(jnp.bfloat16),    # (W, 128)  bf16
            b_out_p.astype(jnp.float32))     # (1, 128)  f32


def skorch_mlp_forward(x, prepped):
    (w_all, bias_all, w_out_p, b_out_p) = prepped
    n = x.shape[0]

    # Batch tile:
    #   * small n  -> one grid step covering the whole (padded) batch;
    #   * large n  -> >= 2 grid steps (v7x: "parallel" axis shards across both
    #                 TensorCores), tile capped at TB_MAX.
    if n <= 512:
        tb = max(16, _round_up(n, 16))
    else:
        tb = min(TB_MAX, _round_up((n + 1) // 2, 16))
    n_pad = _round_up(n, tb)
    grid = (n_pad // tb,)

    # Zero-pad batch rows and feature lanes (IN_FEATURES -> WIDTH): lane-dense x.
    xb = jnp.zeros((n_pad, WIDTH), jnp.bfloat16).at[:n, :IN_FEATURES].set(
        x.astype(jnp.bfloat16))

    out = pl.pallas_call(
        mlp_kernel,
        out_shape=jax.ShapeDtypeStruct((n_pad, OUT_PAD), jnp.float32),
        grid_spec=pltpu.PrefetchScalarGridSpec(
            num_scalar_prefetch=0,
            grid=grid,
            in_specs=[
                pl.BlockSpec((tb, WIDTH), lambda i: (i, 0)),               # x tile
                pl.BlockSpec((DEPTH, WIDTH, WIDTH), lambda i: (0, 0, 0)),  # fused/folded weights
                pl.BlockSpec((DEPTH, 1, WIDTH), lambda i: (0, 0, 0)),      # fused/folded biases
                pl.BlockSpec((WIDTH, OUT_PAD), lambda i: (0, 0)),          # padded w_out
                pl.BlockSpec((1, OUT_PAD), lambda i: (0, 0)),              # padded b_out
            ],
            out_specs=pl.BlockSpec((tb, OUT_PAD), lambda i: (i, 0)),
        ),
        compiler_params=pltpu.CompilerParams(
            dimension_semantics=("parallel",)),
    )(xb, w_all, bias_all, w_out_p, b_out_p)

    return out[:n, :NUM_CLASSES]   # drop batch padding + lane padding


def make_params(key):
    ks = jax.random.split(key, 8)
    w_in = jax.random.normal(ks[0], (IN_FEATURES, WIDTH), jnp.float32) * 0.1
    b_in = jax.random.normal(ks[1], (1, WIDTH), jnp.float32) * 0.1
    w_stack = jax.random.normal(ks[2], (DEPTH, WIDTH, WIDTH), jnp.float32) * 0.05
    bn_g = 1.0 + 0.1 * jax.random.normal(ks[3], (DEPTH, WIDTH), jnp.float32)
    bn_b = 0.1 * jax.random.normal(ks[4], (DEPTH, WIDTH), jnp.float32)
    bn_m = 0.05 * jax.random.normal(ks[5], (DEPTH, WIDTH), jnp.float32)
    bn_v = 1.0 + 0.1 * jax.random.uniform(ks[6], (DEPTH, WIDTH), jnp.float32)
    w_out = jax.random.normal(ks[7], (WIDTH, NUM_CLASSES), jnp.float32) * 0.1
    b_out = jnp.zeros((1, NUM_CLASSES), jnp.float32)
    return (w_in, b_in, w_stack, bn_g, bn_b, bn_m, bn_v, w_out, b_out)


def reference_forward(x, params):
    """Pure-JAX f32 reference of the module's eval-mode forward (unfused)."""
    (w_in, b_in, w_stack, bn_g, bn_b, bn_m, bn_v, w_out, b_out) = params
    h = x @ w_in + b_in
    for d in range(DEPTH):
        z = h @ w_stack[d]
        z = (z - bn_m[d]) / jnp.sqrt(bn_v[d] + BN_EPS) * bn_g[d] + bn_b[d]
        h = jnp.where(z >= 0.0, z, LEAKY_SLOPE * z)
    return h @ w_out + b_out


if __name__ == "__main__":
    key = jax.random.PRNGKey(0)
    k_x, k_p = jax.random.split(key)
    x = jax.random.normal(k_x, (BATCH, IN_FEATURES), jnp.float32)
    params = make_params(k_p)
    prepped = prepare_params(params)      # one-time fold / pad / bf16 cast

    out = skorch_mlp_forward(x, prepped)
    out = jax.block_until_ready(out)

    ref = reference_forward(x, params)
    assert out.shape == (BATCH, NUM_CLASSES)
    # bf16 matmul operands with f32 accumulation -> compare with loose tolerance.
    np.testing.assert_allclose(np.asarray(out), np.asarray(ref),
                               rtol=2e-2, atol=2e-2)
    print("KERNEL_OK")
</pallas_src>

<mosaic_0001>
module attributes {stable_mosaic.version = 11 : i64} {
  func.func @mlp_kernel(%arg0: i32, %arg1: memref<16x128xbf16, #tpu.memory_space<vmem>>, %arg2: memref<3x128x128xbf16, #tpu.memory_space<vmem>>, %arg3: memref<3x1x128xf32, #tpu.memory_space<vmem>>, %arg4: memref<128x128xbf16, #tpu.memory_space<vmem>>, %arg5: memref<1x128xf32, #tpu.memory_space<vmem>>, %arg6: memref<16x128xf32, #tpu.memory_space<vmem>>) attributes {dimension_semantics = [#tpu.dimension_semantics<parallel>], iteration_bounds = array<i64: 1>, scalar_prefetch = 0 : i64, scratch_operands = 0 : i64, tpu.core_type = #tpu.core_type<tc>, window_params = [{transform_indices = @transform_0, window_bounds = array<i64: 16, 128>}, {pipeline_mode = #tpu.pipeline_mode<synchronous>, transform_indices = @transform_1, window_bounds = array<i64: 3, 128, 128>}, {pipeline_mode = #tpu.pipeline_mode<synchronous>, transform_indices = @transform_2, window_bounds = array<i64: 3, 1, 128>}, {pipeline_mode = #tpu.pipeline_mode<synchronous>, transform_indices = @transform_3, window_bounds = array<i64: 128, 128>}, {pipeline_mode = #tpu.pipeline_mode<synchronous>, transform_indices = @transform_4, window_bounds = array<i64: 1, 128>}, {transform_indices = @transform_5, window_bounds = array<i64: 16, 128>}]} {
    %c0 = arith.constant 0 : index
    %c0_0 = arith.constant 0 : index
    %0 = vector.load %arg1[%c0, %c0_0] : memref<16x128xbf16, #tpu.memory_space<vmem>>, vector<16x128xbf16>
    %c0_1 = arith.constant 0 : index
    %c0_2 = arith.constant 0 : index
    %c0_3 = arith.constant 0 : index
    %1 = vector.load %arg2[%c0_1, %c0_2, %c0_3] : memref<3x128x128xbf16, #tpu.memory_space<vmem>>, vector<1x128x128xbf16>
    %2 = vector.shape_cast %1 : vector<1x128x128xbf16> to vector<128x128xbf16>
    %cst = arith.constant dense<0.000000e+00> : vector<16x128xf32>
    %3 = tpu.matmul %0, %2, %cst {dimension_numbers = #tpu.dot_dimension_numbers<[1], [0], [0], [1], [0, 0, 1, 1], [], []>} : vector<16x128xbf16>, vector<128x128xbf16>, vector<16x128xf32> -> vector<16x128xf32>
    %c0_4 = arith.constant 0 : index
    %c0_5 = arith.constant 0 : index
    %c0_6 = arith.constant 0 : index
    %4 = vector.load %arg3[%c0_4, %c0_5, %c0_6] : memref<3x1x128xf32, #tpu.memory_space<vmem>>, vector<1x1x128xf32>
    %5 = vector.shape_cast %4 : vector<1x1x128xf32> to vector<1x128xf32>
    %6 = vector.broadcast %5 : vector<1x128xf32> to vector<16x128xf32>
    %7 = arith.addf %3, %6 : vector<16x128xf32>
    %cst_7 = arith.constant 0.00999999977 : f32
    %8 = vector.broadcast %cst_7 : f32 to vector<16x128xf32>
    %9 = arith.mulf %8, %7 : vector<16x128xf32>
    %10 = arith.maximumf %7, %9 : vector<16x128xf32>
    %11 = arith.truncf %10 : vector<16x128xf32> to vector<16x128xbf16>
    %c1 = arith.constant 1 : index
    %c0_8 = arith.constant 0 : index
    %c0_9 = arith.constant 0 : index
    %12 = vector.load %arg2[%c1, %c0_8, %c0_9] : memref<3x128x128xbf16, #tpu.memory_space<vmem>>, vector<1x128x128xbf16>
    %13 = vector.shape_cast %12 : vector<1x128x128xbf16> to vector<128x128xbf16>
    %cst_10 = arith.constant dense<0.000000e+00> : vector<16x128xf32>
    %14 = tpu.matmul %11, %13, %cst_10 {dimension_numbers = #tpu.dot_dimension_numbers<[1], [0], [0], [1], [0, 0, 1, 1], [], []>} : vector<16x128xbf16>, vector<128x128xbf16>, vector<16x128xf32> -> vector<16x128xf32>
    %c1_11 = arith.constant 1 : index
    %c0_12 = arith.constant 0 : index
    %c0_13 = arith.constant 0 : index
    %15 = vector.load %arg3[%c1_11, %c0_12, %c0_13] : memref<3x1x128xf32, #tpu.memory_space<vmem>>, vector<1x1x128xf32>
    %16 = vector.shape_cast %15 : vector<1x1x128xf32> to vector<1x128xf32>
    %17 = vector.broadcast %16 : vector<1x128xf32> to vector<16x128xf32>
    %18 = arith.addf %14, %17 : vector<16x128xf32>
    %cst_14 = arith.constant 0.00999999977 : f32
    %19 = vector.broadcast %cst_14 : f32 to vector<16x128xf32>
    %20 = arith.mulf %19, %18 : vector<16x128xf32>
    %21 = arith.maximumf %18, %20 : vector<16x128xf32>
    %22 = arith.truncf %21 : vector<16x128xf32> to vector<16x128xbf16>
    %c2 = arith.constant 2 : index
    %c0_15 = arith.constant 0 : index
    %c0_16 = arith.constant 0 : index
    %23 = vector.load %arg2[%c2, %c0_15, %c0_16] : memref<3x128x128xbf16, #tpu.memory_space<vmem>>, vector<1x128x128xbf16>
    %24 = vector.shape_cast %23 : vector<1x128x128xbf16> to vector<128x128xbf16>
    %cst_17 = arith.constant dense<0.000000e+00> : vector<16x128xf32>
    %25 = tpu.matmul %22, %24, %cst_17 {dimension_numbers = #tpu.dot_dimension_numbers<[1], [0], [0], [1], [0, 0, 1, 1], [], []>} : vector<16x128xbf16>, vector<128x128xbf16>, vector<16x128xf32> -> vector<16x128xf32>
    %c2_18 = arith.constant 2 : index
    %c0_19 = arith.constant 0 : index
    %c0_20 = arith.constant 0 : index
    %26 = vector.load %arg3[%c2_18, %c0_19, %c0_20] : memref<3x1x128xf32, #tpu.memory_space<vmem>>, vector<1x1x128xf32>
    %27 = vector.shape_cast %26 : vector<1x1x128xf32> to vector<1x128xf32>
    %28 = vector.broadcast %27 : vector<1x128xf32> to vector<16x128xf32>
    %29 = arith.addf %25, %28 : vector<16x128xf32>
    %cst_21 = arith.constant 0.00999999977 : f32
    %30 = vector.broadcast %cst_21 : f32 to vector<16x128xf32>
    %31 = arith.mulf %30, %29 : vector<16x128xf32>
    %32 = arith.maximumf %29, %31 : vector<16x128xf32>
    %33 = arith.truncf %32 : vector<16x128xf32> to vector<16x128xbf16>
    %c0_22 = arith.constant 0 : index
    %c0_23 = arith.constant 0 : index
    %34 = vector.load %arg4[%c0_22, %c0_23] : memref<128x128xbf16, #tpu.memory_space<vmem>>, vector<128x128xbf16>
    %cst_24 = arith.constant dense<0.000000e+00> : vector<16x128xf32>
    %35 = tpu.matmul %33, %34, %cst_24 {dimension_numbers = #tpu.dot_dimension_numbers<[1], [0], [0], [1], [0, 0, 1, 1], [], []>} : vector<16x128xbf16>, vector<128x128xbf16>, vector<16x128xf32> -> vector<16x128xf32>
    %c0_25 = arith.constant 0 : index
    %c0_26 = arith.constant 0 : index
    %36 = vector.load %arg5[%c0_25, %c0_26] : memref<1x128xf32, #tpu.memory_space<vmem>>, vector<1x128xf32>
    %37 = vector.broadcast %36 : vector<1x128xf32> to vector<16x128xf32>
    %38 = arith.addf %35, %37 : vector<16x128xf32>
    %c0_27 = arith.constant 0 : index
    %c0_28 = arith.constant 0 : index
    %39 = vector.load %arg6[%c0_27, %c0_28] : memref<16x128xf32, #tpu.memory_space<vmem>>, vector<16x128xf32>
    tpu.vector_store %arg6[%c0_27, %c0_28], %38 {strides = array<i32>} : memref<16x128xf32, #tpu.memory_space<vmem>>, vector<16x128xf32>,
    return
  }
  func.func @transform_0(%arg0: i32) -> (i32, i32) {
    %c0_i32 = arith.constant 0 : i32
    %c0_i32_0 = arith.constant 0 : i32
    return %arg0, %c0_i32 : i32, i32
  }
  func.func @transform_1(%arg0: i32) -> (i32, i32, i32) {
    %c0_i32 = arith.constant 0 : i32
    %c0_i32_0 = arith.constant 0 : i32
    %c0_i32_1 = arith.constant 0 : i32
    %c0_i32_2 = arith.constant 0 : i32
    return %c0_i32, %c0_i32_0, %c0_i32_1 : i32, i32, i32
  }
  func.func @transform_2(%arg0: i32) -> (i32, i32, i32) {
    %c0_i32 = arith.constant 0 : i32
    %c0_i32_0 = arith.constant 0 : i32
    %c0_i32_1 = arith.constant 0 : i32
    %c0_i32_2 = arith.constant 0 : i32
    return %c0_i32, %c0_i32_0, %c0_i32_1 : i32, i32, i32
  }
  func.func @transform_3(%arg0: i32) -> (i32, i32) {
    %c0_i32 = arith.constant 0 : i32
    %c0_i32_0 = arith.constant 0 : i32
    %c0_i32_1 = arith.constant 0 : i32
    return %c0_i32, %c0_i32_0 : i32, i32
  }
  func.func @transform_4(%arg0: i32) -> (i32, i32) {
    %c0_i32 = arith.constant 0 : i32
    %c0_i32_0 = arith.constant 0 : i32
    %c0_i32_1 = arith.constant 0 : i32
    return %c0_i32, %c0_i32_0 : i32, i32
  }
  func.func @transform_5(%arg0: i32) -> (i32, i32) {
    %c0_i32 = arith.constant 0 : i32
    %c0_i32_0 = arith.constant 0 : i32
    return %arg0, %c0_i32 : i32, i32
  }
}

</mosaic_0001>

<llo_original>
// kernel: tpu_custom_call.1
$region0: #{tpu_custom_call.1}
  #allocation0 [shape = 'u32[]', space=smem, size = 0x4, offset = 0x4, fixed_abs, tag = 'smem constant byte address 0x4 - core index']
  #allocation1 [shape = 'u32[144,128]{1,0:T(1,128)}', space=vmem, size = 0x12000, scoped, tag = 'internal scratch']
  %s0 = inlined_call_operand.hbm [shape: bf16[16,128], index: 0, kind: input, shape index: {}]
  %s1 = inlined_call_operand.hbm [shape: bf16[3,128,128], index: 1, kind: input, shape index: {}]
  %s2 = inlined_call_operand.vmem [shape: f32[3,1,128], index: 2, kind: input, shape index: {}]
  %s3 = inlined_call_operand.hbm [shape: bf16[128,128], index: 3, kind: input, shape index: {}]
  %s4 = inlined_call_operand.vmem [shape: f32[1,128], index: 4, kind: input, shape index: {}]
  %s5 = inlined_call_operand.hbm [shape: f32[16,128], index: 5, kind: output, shape index: {}]
  %s6 = sld [smem:[#allocation0]]
  $region42: #{tpu_custom_call.1} parent=0
    _
  %s8 = ssub.s32 1, %s6
  %s9 = scalar_select 0, %s8, %s6
  $region1: #{tpu_custom_call.1} parent=0
    #allocation2 [shape = 'u8[4096]{0}', space=vmem, size = 0x1000, scoped, tag = 'input window, operand 0, single buffered']
    #allocation3 [shape = 's32[1]{0}', space=sflag, size = 0x4, scoped, tag = 'scoped memory for tpu_custom_call.1']
    #allocation4 [shape = 's32[1]{0}', space=sflag, size = 0x4, scoped, tag = 'scoped memory for tpu_custom_call.1']
    #allocation5 [shape = 'u8[98304]{0}', space=vmem, size = 0x18000, scoped, tag = 'input window, operand 1, single buffered']
    #allocation6 [shape = 's32[1]{0}', space=sflag, size = 0x4, scoped, tag = 'scoped memory for tpu_custom_call.1']
    #allocation7 [shape = 'u8[32768]{0}', space=vmem, size = 0x8000, scoped, tag = 'input window, operand 3, single buffered']
    #allocation8 [shape = 'u8[8192]{0}', space=vmem, size = 0x2000, scoped, tag = 'output window, operand 0, single buffered']
    %10 = vsyncpa [#allocation3], 0
    %11 = vsyncpa [#allocation6], 0
    %12 = vsyncpa [#allocation4], 0
    // Predicated region
    $region2: #{tpu_custom_call.1} parent=1 // pred_check
      _
    $region3: #{tpu_custom_call.1} parent=1 // pred_check_branch
      %14 = sbr.rel (0) target = $region5
    $region4: #{tpu_custom_call.1} parent=1 // pred_region
      %s16 = ssub.s32 128, 128
      %17 = vsyncadd [#allocation3], %s16
      %s18 = sshll.u32 [#allocation2], 4
      %s19 = int_to_ptr.vmem [resolvable:$true] %s18
      %24 = dma.hbm_to_vmem [thread:$0]  %s0, 128, %s19, [#allocation3], 64, 64, 4
    $region5: #{tpu_custom_call.1} parent=1 // pred_fallthru
      _
    // Predicated region
    $region6: #{tpu_custom_call.1} parent=1 // pred_check
      _
    $region7: #{tpu_custom_call.1} parent=1 // pred_check_branch
      %26 = sbr.rel (0) target = $region9
    $region8: #{tpu_custom_call.1} parent=1 // pred_region
      %s28 = ssub.s32 3072, 3072
      %29 = vsyncadd [#allocation6], %s28
      %s30 = sshll.u32 [#allocation5], 4
      %s31 = int_to_ptr.vmem [resolvable:$true] %s30
      %36 = dma.hbm_to_vmem [thread:$0]  %s1, 3072, %s31, [#allocation6], 64, 64, 4
    $region9: #{tpu_custom_call.1} parent=1 // pred_fallthru
      _
    // Predicated region
    $region10: #{tpu_custom_call.1} parent=1 // pred_check
      _
    $region11: #{tpu_custom_call.1} parent=1 // pred_check_branch
      %38 = sbr.rel (0) target = $region13
    $region12: #{tpu_custom_call.1} parent=1 // pred_region
      _
    $region13: #{tpu_custom_call.1} parent=1 // pred_fallthru
      _
    // Predicated region
    $region14: #{tpu_custom_call.1} parent=1 // pred_check
      _
    $region15: #{tpu_custom_call.1} parent=1 // pred_check_branch
      %40 = sbr.rel (0) target = $region17
    $region16: #{tpu_custom_call.1} parent=1 // pred_region
      %s42 = ssub.s32 1024, 1024
      %43 = vsyncadd [#allocation6], %s42
      %s44 = sshll.u32 [#allocation7], 4
      %s45 = int_to_ptr.vmem [resolvable:$true] %s44
      %50 = dma.hbm_to_vmem [thread:$0]  %s3, 1024, %s45, [#allocation6], 64, 64, 4
    $region17: #{tpu_custom_call.1} parent=1 // pred_fallthru
      _
    // Predicated region
    $region18: #{tpu_custom_call.1} parent=1 // pred_check
      _
    $region19: #{tpu_custom_call.1} parent=1 // pred_check_branch
      %52 = sbr.rel (0) target = $region21
    $region20: #{tpu_custom_call.1} parent=1 // pred_region
      _
    $region21: #{tpu_custom_call.1} parent=1 // pred_fallthru
      _
    // Predicated region
    $region22: #{tpu_custom_call.1} parent=1 // pred_check
      _
    $region23: #{tpu_custom_call.1} parent=1 // pred_check_branch
      %54 = sbr.rel (0) target = $region25
    $region24: #{tpu_custom_call.1} parent=1 // pred_region
      %55 = dma.done [#allocation3], 128
    $region25: #{tpu_custom_call.1} parent=1 // pred_fallthru
      _
    // Predicated region
    $region26: #{tpu_custom_call.1} parent=1 // pred_check
      _
    $region27: #{tpu_custom_call.1} parent=1 // pred_check_branch
      %57 = sbr.rel (0) target = $region29
    $region28: #{tpu_custom_call.1} parent=1 // pred_region
      %58 = dma.done [#allocation6], 3072
    $region29: #{tpu_custom_call.1} parent=1 // pred_fallthru
      _
    // Predicated region
    $region30: #{tpu_custom_call.1} parent=1 // pred_check
      _
    $region31: #{tpu_custom_call.1} parent=1 // pred_check_branch
      %60 = sbr.rel (0) target = $region33
    $region32: #{tpu_custom_call.1} parent=1 // pred_region
      %61 = dma.done [#allocation6], 1024
    $region33: #{tpu_custom_call.1} parent=1 // pred_fallthru
      _
    %v63 = vld [vmem:[#allocation2] sm:$0xf]
    %v64 = vld [vmem:[#allocation2 + $0x4] sm:$0xf]
    %v65 = vld [vmem:[#allocation5] sm:$0xf]
    %v66 = vld [vmem:[#allocation5 + $0x4] sm:$0xf]
    %v67 = vld [vmem:[#allocation5 + $0x8] sm:$0xf]
    %v68 = vld [vmem:[#allocation5 + $0xc] sm:$0xf]
    %v69 = vld [vmem:[#allocation5 + $0x10] sm:$0xf]
    %v70 = vld [vmem:[#allocation5 + $0x14] sm:$0xf]
    %v71 = vld [vmem:[#allocation5 + $0x18] sm:$0xf]
    %v72 = vld [vmem:[#allocation5 + $0x1c] sm:$0xf]
    %v73 = vld [vmem:[#allocation5 + $0x20] sm:$0xf]
    %v74 = vld [vmem:[#allocation5 + $0x24] sm:$0xf]
    %v75 = vld [vmem:[#allocation5 + $0x28] sm:$0xf]
    %v76 = vld [vmem:[#allocation5 + $0x2c] sm:$0xf]
    %v77 = vld [vmem:[#allocation5 + $0x30] sm:$0xf]
    %v78 = vld [vmem:[#allocation5 + $0x34] sm:$0xf]
    %v79 = vld [vmem:[#allocation5 + $0x38] sm:$0xf]
    %v80 = vld [vmem:[#allocation5 + $0x3c] sm:$0xf]
    %v81 = vld [vmem:[%s2] sm:$0x1]
    %v83 = vlaneseq
    %v84 = vshrl.u32 %v83, 7
    %v85 = vsub.s32 0, %v84
    %v86 = vrot.slane %v81, %v85
    %v90 = vunpack.c.l.b16 %v63
    %v91 = vunpack.c.l.b16 %v64
    %v92 = vpack.c.b16 %v91, %v90
    %v110 = vunpack.c.l.b16 %v65
    %v111 = vunpack.c.l.b16 %v66
    %v112 = vunpack.c.l.b16 %v67
    %v113 = vunpack.c.l.b16 %v68
    %v114 = vunpack.c.l.b16 %v69
    %v115 = vunpack.c.l.b16 %v70
    %v116 = vunpack.c.l.b16 %v71
    %v117 = vunpack.c.l.b16 %v72
    %v118 = vunpack.c.l.b16 %v73
    %v119 = vunpack.c.l.b16 %v74
    %v120 = vunpack.c.l.b16 %v75
    %v121 = vunpack.c.l.b16 %v76
    %v122 = vunpack.c.l.b16 %v77
    %v123 = vunpack.c.l.b16 %v78
    %v124 = vunpack.c.l.b16 %v79
    %v125 = vunpack.c.l.b16 %v80
    %v126 = vpack.c.b16 %v111, %v110
    %v127 = vpack.c.b16 %v113, %v112
    %v128 = vpack.c.b16 %v115, %v114
    %v129 = vpack.c.b16 %v117, %v116
    %v130 = vpack.c.b16 %v119, %v118
    %v131 = vpack.c.b16 %v121, %v120
    %v132 = vpack.c.b16 %v123, %v122
    %v133 = vpack.c.b16 %v125, %v124
    %142 = vmatprep.subr.bf16.mxu0 0
    %143 = vmatpush1.bf16.msra.mxu0 %v126
    %144 = vmatprep.subr.bf16.mxu0 0
    %145 = vmatpush1.bf16.msra.mxu0 %v127
    %146 = vmatprep.subr.bf16.mxu0 0
    %147 = vmatpush1.bf16.msra.mxu0 %v128
    %148 = vmatprep.subr.bf16.mxu0 0
    %149 = vmatpush1.bf16.msra.mxu0 %v129
    %150 = vmatprep.subr.bf16.mxu0 0
    %151 = vmatpush1.bf16.msra.mxu0 %v130
    %152 = vmatprep.subr.bf16.mxu0 0
    %153 = vmatpush1.bf16.msra.mxu0 %v131
    %154 = vmatprep.subr.bf16.mxu0 0
    %155 = vmatpush1.bf16.msra.mxu0 %v132
    %156 = vmatprep.subr.bf16.mxu0 0
    %157 = vmatpush1.bf16.msra.mxu0 %v133
    %158 = vmatprep.subr.bf16.mxu0 0
    %159 = vmatpush1.bf16.msra.mxu0 0
    %160 = vmatprep.subr.bf16.mxu0 0
    %161 = vmatpush1.bf16.msra.mxu0 0
    %162 = vmatprep.subr.bf16.mxu0 0
    %163 = vmatpush1.bf16.msra.mxu0 0
    %164 = vmatprep.subr.bf16.mxu0 0
    %165 = vmatpush1.bf16.msra.mxu0 0
    %166 = vmatprep.subr.bf16.mxu0 0
    %167 = vmatpush1.bf16.msra.mxu0 0
    %168 = vmatprep.subr.bf16.mxu0 0
    %169 = vmatpush1.bf16.msra.mxu0 0
    %170 = vmatprep.subr.bf16.mxu0 0
    %171 = vmatpush1.bf16.msra.mxu0 0
    %172 = vmatprep.subr.bf16.mxu0 0
    %173 = vmatpush1.bf16.msra.mxu0 0
    %174 = vmatprep.mubr.bf16.mxu0 0
    %175 = vmatmul.mubr.bf16.gmra.mrb[0].mxu0 %v92
    %v176 = vpop.f32.mrb[0].mxu0
    %v177 = vadd.f32 %v86, %v176
    %v178 = vpop.f32.mrb[0].mxu0
    %v179 = vpop.f32.mrb[0].mxu0
    %v180 = vadd.f32 %v86, %v179
    %v181 = vpop.f32.mrb[0].mxu0
    %182 = vdwg.mxu0
    %v183 = vmul.f32 %v177, 0.01
    %v184 = vmul.f32 %v180, 0.01
    %v185 = vmax.f32 %v177, %v183
    %v186 = vmax.f32 %v180, %v184
    %v187 = vpack.c.bf16 %v186, %v185
    %s188 = scalar_lea.vmem [#allocation5], 64
    %v189 = vld [vmem:[%s188] sm:$0xf]
    %v190 = vld [vmem:[%s188 + $0x4] sm:$0xf]
    %v191 = vld [vmem:[%s188 + $0x8] sm:$0xf]
    %v192 = vld [vmem:[%s188 + $0xc] sm:$0xf]
    %v193 = vld [vmem:[%s188 + $0x10] sm:$0xf]
    %v194 = vld [vmem:[%s188 + $0x14] sm:$0xf]
    %v195 = vld [vmem:[%s188 + $0x18] sm:$0xf]
    %v196 = vld [vmem:[%s188 + $0x1c] sm:$0xf]
    %v197 = vld [vmem:[%s188 + $0x20] sm:$0xf]
    %v198 = vld [vmem:[%s188 + $0x24] sm:$0xf]
    %v199 = vld [vmem:[%s188 + $0x28] sm:$0xf]
    %v200 = vld [vmem:[%s188 + $0x2c] sm:$0xf]
    %v201 = vld [vmem:[%s188 + $0x30] sm:$0xf]
    %v202 = vld [vmem:[%s188 + $0x34] sm:$0xf]
    %v203 = vld [vmem:[%s188 + $0x38] sm:$0xf]
    %v204 = vld [vmem:[%s188 + $0x3c] sm:$0xf]
    %s205 = scalar_lea.vmem %s2, 1
    %v206 = vld [vmem:[%s205] sm:$0x1]
    %v208 = vlaneseq
    %v209 = vshrl.u32 %v208, 7
    %v210 = vsub.s32 0, %v209
    %v211 = vrot.slane %v206, %v210
    %v229 = vunpack.c.l.b16 %v189
    %v230 = vunpack.c.l.b16 %v190
    %v231 = vunpack.c.l.b16 %v191
    %v232 = vunpack.c.l.b16 %v192
    %v233 = vunpack.c.l.b16 %v193
    %v234 = vunpack.c.l.b16 %v194
    %v235 = vunpack.c.l.b16 %v195
    %v236 = vunpack.c.l.b16 %v196
    %v237 = vunpack.c.l.b16 %v197
    %v238 = vunpack.c.l.b16 %v198
    %v239 = vunpack.c.l.b16 %v199
    %v240 = vunpack.c.l.b16 %v200
    %v241 = vunpack.c.l.b16 %v201
    %v242 = vunpack.c.l.b16 %v202
    %v243 = vunpack.c.l.b16 %v203
    %v244 = vunpack.c.l.b16 %v204
    %v245 = vpack.c.b16 %v230, %v229
    %v246 = vpack.c.b16 %v232, %v231
    %v247 = vpack.c.b16 %v234, %v233
    %v248 = vpack.c.b16 %v236, %v235
    %v249 = vpack.c.b16 %v238, %v237
    %v250 = vpack.c.b16 %v240, %v239
    %v251 = vpack.c.b16 %v242, %v241
    %v252 = vpack.c.b16 %v244, %v243
    %261 = vmatprep.subr.bf16.mxu0 0
    %262 = vmatpush1.bf16.msra.mxu0 %v245
    %263 = vmatprep.subr.bf16.mxu0 0
    %264 = vmatpush1.bf16.msra.mxu0 %v246
    %265 = vmatprep.subr.bf16.mxu0 0
    %266 = vmatpush1.bf16.msra.mxu0 %v247
    %267 = vmatprep.subr.bf16.mxu0 0
    %268 = vmatpush1.bf16.msra.mxu0 %v248
    %269 = vmatprep.subr.bf16.mxu0 0
    %270 = vmatpush1.bf16.msra.mxu0 %v249
    %271 = vmatprep.subr.bf16.mxu0 0
    %272 = vmatpush1.bf16.msra.mxu0 %v250
    %273 = vmatprep.subr.bf16.mxu0 0
    %274 = vmatpush1.bf16.msra.mxu0 %v251
    %275 = vmatprep.subr.bf16.mxu0 0
    %276 = vmatpush1.bf16.msra.mxu0 %v252
    %277 = vmatprep.subr.bf16.mxu0 0
    %278 = vmatpush1.bf16.msra.mxu0 0
    %279 = vmatprep.subr.bf16.mxu0 0
    %280 = vmatpush1.bf16.msra.mxu0 0
    %281 = vmatprep.subr.bf16.mxu0 0
    %282 = vmatpush1.bf16.msra.mxu0 0
    %283 = vmatprep.subr.bf16.mxu0 0
    %284 = vmatpush1.bf16.msra.mxu0 0
    %285 = vmatprep.subr.bf16.mxu0 0
    %286 = vmatpush1.bf16.msra.mxu0 0
    %287 = vmatprep.subr.bf16.mxu0 0
    %288 = vmatpush1.bf16.msra.mxu0 0
    %289 = vmatprep.subr.bf16.mxu0 0
    %290 = vmatpush1.bf16.msra.mxu0 0
    %291 = vmatprep.subr.bf16.mxu0 0
    %292 = vmatpush1.bf16.msra.mxu0 0
    %293 = vmatprep.mubr.bf16.mxu0 0
    %294 = vmatmul.mubr.bf16.gmra.mrb[0].mxu0 %v187
    %v295 = vpop.f32.mrb[0].mxu0
    %v296 = vadd.f32 %v211, %v295
    %v297 = vpop.f32.mrb[0].mxu0
    %v298 = vpop.f32.mrb[0].mxu0
    %v299 = vadd.f32 %v211, %v298
    %v300 = vpop.f32.mrb[0].mxu0
    %301 = vdwg.mxu0
    %v302 = vmul.f32 %v296, 0.01
    %v303 = vmul.f32 %v299, 0.01
    %v304 = vmax.f32 %v296, %v302
    %v305 = vmax.f32 %v299, %v303
    %v306 = vpack.c.bf16 %v305, %v304
    %s307 = scalar_lea.vmem [#allocation5], 128
    %v308 = vld [vmem:[%s307] sm:$0xf]
    %v309 = vld [vmem:[%s307 + $0x4] sm:$0xf]
    %v310 = vld [vmem:[%s307 + $0x8] sm:$0xf]
    %v311 = vld [vmem:[%s307 + $0xc] sm:$0xf]
    %v312 = vld [vmem:[%s307 + $0x10] sm:$0xf]
    %v313 = vld [vmem:[%s307 + $0x14] sm:$0xf]
    %v314 = vld [vmem:[%s307 + $0x18] sm:$0xf]
    %v315 = vld [vmem:[%s307 + $0x1c] sm:$0xf]
    %v316 = vld [vmem:[%s307 + $0x20] sm:$0xf]
    %v317 = vld [vmem:[%s307 + $0x24] sm:$0xf]
    %v318 = vld [vmem:[%s307 + $0x28] sm:$0xf]
    %v319 = vld [vmem:[%s307 + $0x2c] sm:$0xf]
    %v320 = vld [vmem:[%s307 + $0x30] sm:$0xf]
    %v321 = vld [vmem:[%s307 + $0x34] sm:$0xf]
    %v322 = vld [vmem:[%s307 + $0x38] sm:$0xf]
    %v323 = vld [vmem:[%s307 + $0x3c] sm:$0xf]
    %s324 = scalar_lea.vmem %s2, 2
    %v325 = vld [vmem:[%s324] sm:$0x1]
    %v327 = vlaneseq
    %v328 = vshrl.u32 %v327, 7
    %v329 = vsub.s32 0, %v328
    %v330 = vrot.slane %v325, %v329
    %v348 = vunpack.c.l.b16 %v308
    %v349 = vunpack.c.l.b16 %v309
    %v350 = vunpack.c.l.b16 %v310
    %v351 = vunpack.c.l.b16 %v311
    %v352 = vunpack.c.l.b16 %v312
    %v353 = vunpack.c.l.b16 %v313
    %v354 = vunpack.c.l.b16 %v314
    %v355 = vunpack.c.l.b16 %v315
    %v356 = vunpack.c.l.b16 %v316
    %v357 = vunpack.c.l.b16 %v317
    %v358 = vunpack.c.l.b16 %v318
    %v359 = vunpack.c.l.b16 %v319
    %v360 = vunpack.c.l.b16 %v320
    %v361 = vunpack.c.l.b16 %v321
    %v362 = vunpack.c.l.b16 %v322
    %v363 = vunpack.c.l.b16 %v323
    %v364 = vpack.c.b16 %v349, %v348
    %v365 = vpack.c.b16 %v351, %v350
    %v366 = vpack.c.b16 %v353, %v352
    %v367 = vpack.c.b16 %v355, %v354
    %v368 = vpack.c.b16 %v357, %v356
    %v369 = vpack.c.b16 %v359, %v358
    %v370 = vpack.c.b16 %v361, %v360
    %v371 = vpack.c.b16 %v363, %v362
    %380 = vmatprep.subr.bf16.mxu0 0
    %381 = vmatpush1.bf16.msra.mxu0 %v364
    %382 = vmatprep.subr.bf16.mxu0 0
    %383 = vmatpush1.bf16.msra.mxu0 %v365
    %384 = vmatprep.subr.bf16.mxu0 0
    %385 = vmatpush1.bf16.msra.mxu0 %v366
    %386 = vmatprep.subr.bf16.mxu0 0
    %387 = vmatpush1.bf16.msra.mxu0 %v367
    %388 = vmatprep.subr.bf16.mxu0 0
    %389 = vmatpush1.bf16.msra.mxu0 %v368
    %390 = vmatprep.subr.bf16.mxu0 0
    %391 = vmatpush1.bf16.msra.mxu0 %v369
    %392 = vmatprep.subr.bf16.mxu0 0
    %393 = vmatpush1.bf16.msra.mxu0 %v370
    %394 = vmatprep.subr.bf16.mxu0 0
    %395 = vmatpush1.bf16.msra.mxu0 %v371
    %396 = vmatprep.subr.bf16.mxu0 0
    %397 = vmatpush1.bf16.msra.mxu0 0
    %398 = vmatprep.subr.bf16.mxu0 0
    %399 = vmatpush1.bf16.msra.mxu0 0
    %400 = vmatprep.subr.bf16.mxu0 0
    %401 = vmatpush1.bf16.msra.mxu0 0
    %402 = vmatprep.subr.bf16.mxu0 0
    %403 = vmatpush1.bf16.msra.mxu0 0
    %404 = vmatprep.subr.bf16.mxu0 0
    %405 = vmatpush1.bf16.msra.mxu0 0
    %406 = vmatprep.subr.bf16.mxu0 0
    %407 = vmatpush1.bf16.msra.mxu0 0
    %408 = vmatprep.subr.bf16.mxu0 0
    %409 = vmatpush1.bf16.msra.mxu0 0
    %410 = vmatprep.subr.bf16.mxu0 0
    %411 = vmatpush1.bf16.msra.mxu0 0
    %412 = vmatprep.mubr.bf16.mxu0 0
    %413 = vmatmul.mubr.bf16.gmra.mrb[0].mxu0 %v306
    %v414 = vpop.f32.mrb[0].mxu0
    %v415 = vadd.f32 %v330, %v414
    %v416 = vpop.f32.mrb[0].mxu0
    %v417 = vpop.f32.mrb[0].mxu0
    %v418 = vadd.f32 %v330, %v417
    %v419 = vpop.f32.mrb[0].mxu0
    %420 = vdwg.mxu0
    %v421 = vmul.f32 %v415, 0.01
    %v422 = vmul.f32 %v418, 0.01
    %v423 = vmax.f32 %v415, %v421
    %v424 = vmax.f32 %v418, %v422
    %v425 = vpack.c.bf16 %v424, %v423
    %v426 = vld [vmem:[#allocation7] sm:$0xf]
    %v427 = vld [vmem:[#allocation7 + $0x4] sm:$0xf]
    %v428 = vld [vmem:[#allocation7 + $0x8] sm:$0xf]
    %v429 = vld [vmem:[#allocation7 + $0xc] sm:$0xf]
    %v430 = vld [vmem:[#allocation7 + $0x10] sm:$0xf]
    %v431 = vld [vmem:[#allocation7 + $0x14] sm:$0xf]
    %v432 = vld [vmem:[#allocation7 + $0x18] sm:$0xf]
    %v433 = vld [vmem:[#allocation7 + $0x1c] sm:$0xf]
    %v434 = vld [vmem:[#allocation7 + $0x20] sm:$0xf]
    %v435 = vld [vmem:[#allocation7 + $0x24] sm:$0xf]
    %v436 = vld [vmem:[#allocation7 + $0x28] sm:$0xf]
    %v437 = vld [vmem:[#allocation7 + $0x2c] sm:$0xf]
    %v438 = vld [vmem:[#allocation7 + $0x30] sm:$0xf]
    %v439 = vld [vmem:[#allocation7 + $0x34] sm:$0xf]
    %v440 = vld [vmem:[#allocation7 + $0x38] sm:$0xf]
    %v441 = vld [vmem:[#allocation7 + $0x3c] sm:$0xf]
    %v442 = vld [vmem:[%s4] sm:$0x1]
    %v444 = vlaneseq
    %v445 = vshrl.u32 %v444, 7
    %v446 = vsub.s32 0, %v445
    %v447 = vrot.slane %v442, %v446
    %v465 = vunpack.c.l.b16 %v426
    %v466 = vunpack.c.l.b16 %v427
    %v467 = vunpack.c.l.b16 %v428
    %v468 = vunpack.c.l.b16 %v429
    %v469 = vunpack.c.l.b16 %v430
    %v470 = vunpack.c.l.b16 %v431
    %v471 = vunpack.c.l.b16 %v432
    %v472 = vunpack.c.l.b16 %v433
    %v473 = vunpack.c.l.b16 %v434
    %v474 = vunpack.c.l.b16 %v435
    %v475 = vunpack.c.l.b16 %v436
    %v476 = vunpack.c.l.b16 %v437
    %v477 = vunpack.c.l.b16 %v438
    %v478 = vunpack.c.l.b16 %v439
    %v479 = vunpack.c.l.b16 %v440
    %v480 = vunpack.c.l.b16 %v441
    %v481 = vpack.c.b16 %v466, %v465
    %v482 = vpack.c.b16 %v468, %v467
    %v483 = vpack.c.b16 %v470, %v469
    %v484 = vpack.c.b16 %v472, %v471
    %v485 = vpack.c.b16 %v474, %v473
    %v486 = vpack.c.b16 %v476, %v475
    %v487 = vpack.c.b16 %v478, %v477
    %v488 = vpack.c.b16 %v480, %v479
    %497 = vmatprep.subr.bf16.mxu0 0
    %498 = vmatpush1.bf16.msra.mxu0 %v481
    %499 = vmatprep.subr.bf16.mxu0 0
    %500 = vmatpush1.bf16.msra.mxu0 %v482
    %501 = vmatprep.subr.bf16.mxu0 0
    %502 = vmatpush1.bf16.msra.mxu0 %v483
    %503 = vmatprep.subr.bf16.mxu0 0
    %504 = vmatpush1.bf16.msra.mxu0 %v484
    %505 = vmatprep.subr.bf16.mxu0 0
    %506 = vmatpush1.bf16.msra.mxu0 %v485
    %507 = vmatprep.subr.bf16.mxu0 0
    %508 = vmatpush1.bf16.msra.mxu0 %v486
    %509 = vmatprep.subr.bf16.mxu0 0
    %510 = vmatpush1.bf16.msra.mxu0 %v487
    %511 = vmatprep.subr.bf16.mxu0 0
    %512 = vmatpush1.bf16.msra.mxu0 %v488
    %513 = vmatprep.subr.bf16.mxu0 0
    %514 = vmatpush1.bf16.msra.mxu0 0
    %515 = vmatprep.subr.bf16.mxu0 0
    %516 = vmatpush1.bf16.msra.mxu0 0
    %517 = vmatprep.subr.bf16.mxu0 0
    %518 = vmatpush1.bf16.msra.mxu0 0
    %519 = vmatprep.subr.bf16.mxu0 0
    %520 = vmatpush1.bf16.msra.mxu0 0
    %521 = vmatprep.subr.bf16.mxu0 0
    %522 = vmatpush1.bf16.msra.mxu0 0
    %523 = vmatprep.subr.bf16.mxu0 0
    %524 = vmatpush1.bf16.msra.mxu0 0
    %525 = vmatprep.subr.bf16.mxu0 0
    %526 = vmatpush1.bf16.msra.mxu0 0
    %527 = vmatprep.subr.bf16.mxu0 0
    %528 = vmatpush1.bf16.msra.mxu0 0
    %529 = vmatprep.mubr.bf16.mxu0 0
    %530 = vmatmul.mubr.bf16.gmra.mrb[0].mxu0 %v425
    %v531 = vpop.f32.mrb[0].mxu0
    %v532 = vadd.f32 %v447, %v531
    %v533 = vpop.f32.mrb[0].mxu0
    %v534 = vpop.f32.mrb[0].mxu0
    %v535 = vadd.f32 %v447, %v534
    %v536 = vpop.f32.mrb[0].mxu0
    %537 = vdwg.mxu0
    %538 = vst [vmem:[#allocation8] sm:$0xff] %v532
    %539 = vst [vmem:[#allocation8 + $0x8] sm:$0xff] %v535
    // Predicated region
    $region34: #{tpu_custom_call.1} parent=1 // pred_check
      _
    $region35: #{tpu_custom_call.1} parent=1 // pred_check_branch
      %541 = sbr.rel (0) target = $region37
    $region36: #{tpu_custom_call.1} parent=1 // pred_region
      %s543 = ssub.s32 256, 256
      %544 = vsyncadd [#allocation4], %s543
      %s545 = sshll.u32 [#allocation8], 4
      %s546 = int_to_ptr.vmem [resolvable:$true] %s545
      %551 = dma.vmem_to_hbm [thread:$0]  %s546, 256, %s5, [#allocation4], 128, 128, 8
    $region37: #{tpu_custom_call.1} parent=1 // pred_fallthru
      _
    // Predicated region
    $region38: #{tpu_custom_call.1} parent=1 // pred_check
      _
    $region39: #{tpu_custom_call.1} parent=1 // pred_check_branch
      %553 = sbr.rel (0) target = $region41
    $region40: #{tpu_custom_call.1} parent=1 // pred_region
      %554 = dma.done [#allocation4], 256
    $region41: #{tpu_custom_call.1} parent=1 // pred_fallthru
      _
    %555 = vsyncpa [#allocation3], 1
    %556 = vsyncpa [#allocation6], 1
    %557 = vsyncpa [#allocation4], 1

</llo_original>
